<compile_context>
chip_gen: v7x
topology: tpu7x:2x2x1
jax: 0.10.0
libtpu: 0.0.40
codegen_flags: <defaults>
</compile_context>

<pallas_src>
import jax
import jax.numpy as jnp
from jax import lax
from jax.experimental import pallas as pl
from jax.experimental.pallas import tpu as pltpu

block_size = 8
head_size = 8
n_embd = 32


def head_kernel(x_ref, w_ref, o_ref):
    # x_ref: (T, C)   w_ref: (C, 3H)   o_ref: (T, H)
    T = x_ref.shape[0]
    H = o_ref.shape[1]

    x = x_ref[...].astype(jnp.float32)

    # Fused QKV projection: one MXU push instead of three.
    qkv = jnp.dot(x, w_ref[...], preferred_element_type=jnp.float32)   # (T, 3H)
    q = qkv[:, 0 * H:1 * H]   # scale already folded into the Wq columns
    k = qkv[:, 1 * H:2 * H]
    v = qkv[:, 2 * H:3 * H]

    # wei = q @ k^T with the transpose absorbed into the contraction.
    wei = lax.dot_general(
        q, k,
        dimension_numbers=(((1,), (1,)), ((), ())),
        preferred_element_type=jnp.float32,
    )                                                                   # (T, T)

    # Causal mask generated in-kernel (row >= col keeps the entry).
    row = lax.broadcasted_iota(jnp.int32, (T, T), 0)
    col = lax.broadcasted_iota(jnp.int32, (T, T), 1)
    wei = jnp.where(row >= col, wei, jnp.float32(-1e30))

    # Numerically stable softmax; reciprocal on the EUP slot.
    wei = wei - jnp.max(wei, axis=-1, keepdims=True)
    p = jnp.exp(wei)
    p = p * pl.reciprocal(jnp.sum(p, axis=-1, keepdims=True), approx=True)

    o_ref[...] = jnp.dot(p, v, preferred_element_type=jnp.float32).astype(o_ref.dtype)


def head_forward(x, wq, wk, wv):
    """x: (B, T, C) f32 with B == 1 (module semantics); wq/wk/wv: (C, H) f32."""
    B, T, C = x.shape
    assert B == 1, "Head.forward always operates on B=1 (x = randn((1,1,32)))"
    assert T <= block_size, "T must not exceed block_size (causal mask extent)"
    H = wq.shape[1]

    # Fold the attention scale into Wq and fuse the three projections.
    scale = float(head_size) ** -0.5
    w_qkv = jnp.concatenate([wq * scale, wk, wv], axis=1)               # (C, 3H)

    x2d = x.reshape(T, C)

    out2d = pl.pallas_call(
        head_kernel,
        out_shape=jax.ShapeDtypeStruct((T, H), jnp.float32),
    )(x2d, w_qkv)

    return out2d.reshape(B, T, H)


def head_reference(x, wq, wk, wv):
    """Pure-JAX reference of the PyTorch forward (after x is replaced)."""
    B, T, C = x.shape
    q = x @ wq
    k = x @ wk
    v = x @ wv
    wei = (q @ jnp.swapaxes(k, -1, -2)) * (k.shape[-1] ** -0.5)
    tril = jnp.tril(jnp.ones((block_size, block_size), dtype=jnp.float32))
    wei = jnp.where(tril[:T, :T] == 0.0, -jnp.inf, wei)
    wei = jax.nn.softmax(wei, axis=-1)
    return wei @ v


if __name__ == "__main__":
    key = jax.random.PRNGKey(0)
    k_in, k_rand, kq, kk, kv = jax.random.split(key, 5)

    # The caller-provided input (ignored by the forward, like in PyTorch).
    x_caller = jax.random.normal(k_in, (2, block_size, n_embd), dtype=jnp.float32)

    # TODO(synk): reference forward calls torch.randn each invocation
    # (nondeterministic); reproduced here with a fixed PRNG key instead.
    x = jax.random.normal(k_rand, (1, 1, n_embd), dtype=jnp.float32)   # (B=1, T=1, C=32)

    # Deterministic parameter init (nn.Linear(n_embd, head_size, bias=False)).
    # Stored pre-transposed: (n_embd, head_size) so the kernel computes x @ W.
    bound = 1.0 / (n_embd ** 0.5)
    wq = jax.random.uniform(kq, (n_embd, head_size), jnp.float32, -bound, bound)
    wk = jax.random.uniform(kk, (n_embd, head_size), jnp.float32, -bound, bound)
    wv = jax.random.uniform(kv, (n_embd, head_size), jnp.float32, -bound, bound)

    del x_caller  # forward ignores its argument

    out = head_forward(x, wq, wk, wv)
    out = jax.block_until_ready(out)

    ref = head_reference(x, wq, wk, wv)
    assert out.shape == (1, 1, head_size)
    # Slightly relaxed tolerance: softmax denominator uses the EUP approximate
    # reciprocal (pl.reciprocal(approx=True)).
    assert jnp.allclose(out, ref, atol=1e-2, rtol=1e-2), "mismatch vs reference"

    print("KERNEL_OK")
</pallas_src>

<mosaic_0001>
module attributes {stable_mosaic.version = 11 : i64} {
  func.func @head_kernel(%arg0: memref<1x32xf32, #tpu.memory_space<vmem>>, %arg1: memref<32x24xf32, #tpu.memory_space<vmem>>, %arg2: memref<1x8xf32, #tpu.memory_space<vmem>>) attributes {dimension_semantics = [], scalar_prefetch = 0 : i64, scratch_operands = 0 : i64, tpu.core_type = #tpu.core_type<tc>} {
    %c0 = arith.constant 0 : index
    %c0_0 = arith.constant 0 : index
    %0 = vector.load %arg0[%c0, %c0_0] : memref<1x32xf32, #tpu.memory_space<vmem>>, vector<1x32xf32>
    %c0_1 = arith.constant 0 : index
    %c0_2 = arith.constant 0 : index
    %1 = vector.load %arg1[%c0_1, %c0_2] : memref<32x24xf32, #tpu.memory_space<vmem>>, vector<32x24xf32>
    %cst = arith.constant dense<0.000000e+00> : vector<1x24xf32>
    %2 = tpu.matmul %0, %1, %cst {dimension_numbers = #tpu.dot_dimension_numbers<[1], [0], [0], [1], [0, 0, 1, 1], [], []>} : vector<1x32xf32>, vector<32x24xf32>, vector<1x24xf32> -> vector<1x24xf32>
    %3 = vector.extract_strided_slice %2 {offsets = [0, 0], sizes = [1, 8], strides = [1, 1]} : vector<1x24xf32> to vector<1x8xf32>
    %4 = vector.extract_strided_slice %2 {offsets = [0, 8], sizes = [1, 8], strides = [1, 1]} : vector<1x24xf32> to vector<1x8xf32>
    %5 = vector.extract_strided_slice %2 {offsets = [0, 16], sizes = [1, 8], strides = [1, 1]} : vector<1x24xf32> to vector<1x8xf32>
    %cst_3 = arith.constant dense<0.000000e+00> : vector<1x1xf32>
    %6 = tpu.matmul %3, %4, %cst_3 {dimension_numbers = #tpu.dot_dimension_numbers<[1], [1], [0], [0], [0, 0, 1, 0], [], []>} : vector<1x8xf32>, vector<1x8xf32>, vector<1x1xf32> -> vector<1x1xf32>
    %7 = tpu.iota {dimensions = array<i32: 0>} : vector<1x1xi32>
    %8 = tpu.iota {dimensions = array<i32: 1>} : vector<1x1xi32>
    %9 = arith.cmpi sge, %7, %8 : vector<1x1xi32>
    %cst_4 = arith.constant -1.000000e+30 : f32
    %10 = vector.broadcast %cst_4 : f32 to vector<1x1xf32>
    %11 = arith.select %9, %6, %10 : vector<1x1xi1>, vector<1x1xf32>
    %cst_5 = arith.constant dense<0xFF800000> : vector<1xf32>
    %12 = vector.multi_reduction <maximumf>, %11, %cst_5 [1] : vector<1x1xf32> to vector<1xf32>
    %13 = vector.shape_cast %12 : vector<1xf32> to vector<1x1xf32>
    %14 = arith.subf %11, %13 : vector<1x1xf32>
    %15 = math.exp %14 : vector<1x1xf32>
    %cst_6 = arith.constant dense<0.000000e+00> : vector<1xf32>
    %16 = vector.multi_reduction <add>, %15, %cst_6 [1] : vector<1x1xf32> to vector<1xf32>
    %17 = vector.shape_cast %16 : vector<1xf32> to vector<1x1xf32>
    %18 = tpu.reciprocal %17 {approx = true} : vector<1x1xf32> -> vector<1x1xf32>
    %19 = arith.mulf %15, %18 : vector<1x1xf32>
    %cst_7 = arith.constant dense<0.000000e+00> : vector<1x8xf32>
    %20 = tpu.matmul %19, %5, %cst_7 {dimension_numbers = #tpu.dot_dimension_numbers<[1], [0], [0], [1], [0, 0, 1, 1], [], []>} : vector<1x1xf32>, vector<1x8xf32>, vector<1x8xf32> -> vector<1x8xf32>
    %c0_8 = arith.constant 0 : index
    %c0_9 = arith.constant 0 : index
    %21 = vector.load %arg2[%c0_8, %c0_9] : memref<1x8xf32, #tpu.memory_space<vmem>>, vector<1x8xf32>
    tpu.vector_store %arg2[%c0_8, %c0_9], %20 {strides = array<i32>} : memref<1x8xf32, #tpu.memory_space<vmem>>, vector<1x8xf32>,
    return
  }
}

</mosaic_0001>

<llo_original>
// kernel: tpu_custom_call.1
$region0: #{tpu_custom_call.1}
  #allocation0 [shape = 'u32[]', space=smem, size = 0x4, offset = 0x4, fixed_abs, tag = 'smem constant byte address 0x4 - core index']
  #allocation1 [shape = 'u32[144,128]{1,0:T(1,128)}', space=vmem, size = 0x12000, scoped, tag = 'internal scratch']
  %s0 = inlined_call_operand.vmem [shape: f32[1,32], index: 0, kind: input, shape index: {}]
  %s1 = inlined_call_operand.vmem [shape: f32[32,24], index: 1, kind: input, shape index: {}]
  %s2 = inlined_call_operand.hbm [shape: f32[1,8], index: 2, kind: output, shape index: {}]
  %s3 = sld [smem:[#allocation0]]
  $region18: #{tpu_custom_call.1} parent=0
    _
  %s5 = ssub.s32 1, %s3
  %s6 = scalar_select 0, %s5, %s3
  $region1: #{tpu_custom_call.1} parent=0
    #allocation2 [shape = 'u8[512]{0}', space=vmem, size = 0x400, scoped, tag = 'output window, operand 0, single buffered']
    #allocation3 [shape = 's32[1]{0}', space=sflag, size = 0x4, scoped, tag = 'scoped memory for tpu_custom_call.1']
    %7 = vsyncpa [#allocation3], 0
    // Predicated region
    $region2: #{tpu_custom_call.1} parent=1 // pred_check
      _
    $region3: #{tpu_custom_call.1} parent=1 // pred_check_branch
      %9 = sbr.rel (0) target = $region5
    $region4: #{tpu_custom_call.1} parent=1 // pred_region
      _
    $region5: #{tpu_custom_call.1} parent=1 // pred_fallthru
      _
    // Predicated region
    $region6: #{tpu_custom_call.1} parent=1 // pred_check
      _
    $region7: #{tpu_custom_call.1} parent=1 // pred_check_branch
      %11 = sbr.rel (0) target = $region9
    $region8: #{tpu_custom_call.1} parent=1 // pred_region
      _
    $region9: #{tpu_custom_call.1} parent=1 // pred_fallthru
      _
    %v12 = vld [vmem:[%s0] sm:$0x1]
    %v13 = vld [vmem:[%s1] sm:$0xff]
    %v14 = vld [vmem:[%s1 + $0x8] sm:$0xff]
    %v15 = vld [vmem:[%s1 + $0x10] sm:$0xff]
    %v16 = vld [vmem:[%s1 + $0x18] sm:$0xff]
    %vm17 = vcmask 261120
    %v19 = vsel %vm17, %v12, 0
    %21 = vmatprep.subr.mxu0 0.0
    %22 = vmatpush1.msra.mxu0 %v13
    %23 = vmatprep.subr.mxu0 0.0
    %24 = vmatpush1.msra.mxu0 %v14
    %25 = vmatprep.subr.mxu0 0.0
    %26 = vmatpush1.msra.mxu0 %v15
    %27 = vmatprep.subr.mxu0 0.0
    %28 = vmatpush1.msra.mxu0 %v16
    %29 = vmatprep.subr.mxu0 0.0
    %30 = vmatpush1.msra.mxu0 0.0
    %31 = vmatprep.subr.mxu0 0.0
    %32 = vmatpush1.msra.mxu0 0.0
    %33 = vmatprep.subr.mxu0 0.0
    %34 = vmatpush1.msra.mxu0 0.0
    %35 = vmatprep.subr.mxu0 0.0
    %36 = vmatpush1.msra.mxu0 0.0
    %37 = vmatprep.subr.mxu0 0.0
    %38 = vmatpush1.msra.mxu0 0.0
    %39 = vmatprep.subr.mxu0 0.0
    %40 = vmatpush1.msra.mxu0 0.0
    %41 = vmatprep.subr.mxu0 0.0
    %42 = vmatpush1.msra.mxu0 0.0
    %43 = vmatprep.subr.mxu0 0.0
    %44 = vmatpush1.msra.mxu0 0.0
    %45 = vmatprep.subr.mxu0 0.0
    %46 = vmatpush1.msra.mxu0 0.0
    %47 = vmatprep.subr.mxu0 0.0
    %48 = vmatpush1.msra.mxu0 0.0
    %49 = vmatprep.subr.mxu0 0.0
    %50 = vmatpush1.msra.mxu0 0.0
    %51 = vmatprep.subr.mxu0 0.0
    %52 = vmatpush1.msra.mxu0 0.0
    %53 = vmatprep.subr.mxu0 0.0
    %54 = vmatpush1.msra.mxu0 0.0
    %55 = vmatprep.subr.mxu0 0.0
    %56 = vmatpush1.msra.mxu0 0.0
    %57 = vmatprep.subr.mxu0 0.0
    %58 = vmatpush1.msra.mxu0 0.0
    %59 = vmatprep.subr.mxu0 0.0
    %60 = vmatpush1.msra.mxu0 0.0
    %61 = vmatprep.subr.mxu0 0.0
    %62 = vmatpush1.msra.mxu0 0.0
    %63 = vmatprep.subr.mxu0 0.0
    %64 = vmatpush1.msra.mxu0 0.0
    %65 = vmatprep.subr.mxu0 0.0
    %66 = vmatpush1.msra.mxu0 0.0
    %67 = vmatprep.subr.mxu0 0.0
    %68 = vmatpush1.msra.mxu0 0.0
    %69 = vmatprep.subr.mxu0 0.0
    %70 = vmatpush1.msra.mxu0 0.0
    %71 = vmatprep.subr.mxu0 0.0
    %72 = vmatpush1.msra.mxu0 0.0
    %73 = vmatprep.subr.mxu0 0.0
    %74 = vmatpush1.msra.mxu0 0.0
    %75 = vmatprep.subr.mxu0 0.0
    %76 = vmatpush1.msra.mxu0 0.0
    %77 = vmatprep.subr.mxu0 0.0
    %78 = vmatpush1.msra.mxu0 0.0
    %79 = vmatprep.subr.mxu0 0.0
    %80 = vmatpush1.msra.mxu0 0.0
    %81 = vmatprep.subr.mxu0 0.0
    %82 = vmatpush1.msra.mxu0 0.0
    %83 = vmatprep.subr.mxu0 0.0
    %84 = vmatpush1.msra.mxu0 0.0
    %85 = vmatprep.mubr.f32.mxu0 0.0
    %86 = vmatmul.mubr.f32.gmra.mrb[0].mxu0 %v19
    %v87 = vpop.f32.mrb[0].mxu0
    %v88 = vadd.f32 0.0, %v87
    %v89 = vpop.f32.mrb[0].mxu0
    %90 = vdwg.mxu0
    %92 = vrot.lane.b32.xlu0 %v88, 120
    %v93 = vpop.permute.xlu0 %92
    %v95 = vmul.f32 %v88, %v93
    %vm96 = vcmask 57344
    %v97 = vsel %vm96, %v95, 0.0
    %98 = vadd.xlane.f32.xlu0 %v97
    %v99 = vpop.xlane.xlu0 %98
    %v100 = vlaneseq
    %v101 = vshrl.u32 %v100, 7
    %v102 = vlaneseq
    %v103 = vand.u32 %v102, 127
    %vm104 = vcmp.ge.s32.totalorder %v101, %v103
    %v105 = vsel %vm104, %v99, -1e+30
    %v106 = vsub.f32 %v105, %v105
    %v107 = vmul.f32 %v106, 1.442695
    %v108 = vpow.pop %v107
    %v109 = vadd.f32 %v108, 0.0
    %v110 = vrcp.pop %v109
    %v111 = vmul.f32 %v108, %v110
    %112 = vrot.lane.b32.xlu0 %v88, 112
    %v113 = vpop.permute.xlu0 %112
    %vm114 = vcmask 7168
    %v116 = vsel %vm114, %v111, 0
    %vm118 = vcmask 1040384
    %v119 = vsel %vm118, %v113, 0
    %121 = vmatprep.subr.mxu0 0.0
    %122 = vmatpush1.msra.mxu0 %v119
    %123 = vmatprep.subr.mxu0 0.0
    %124 = vmatpush1.msra.mxu0 0.0
    %125 = vmatprep.subr.mxu0 0.0
    %126 = vmatpush1.msra.mxu0 0.0
    %127 = vmatprep.subr.mxu0 0.0
    %128 = vmatpush1.msra.mxu0 0.0
    %129 = vmatprep.subr.mxu0 0.0
    %130 = vmatpush1.msra.mxu0 0.0
    %131 = vmatprep.subr.mxu0 0.0
    %132 = vmatpush1.msra.mxu0 0.0
    %133 = vmatprep.subr.mxu0 0.0
    %134 = vmatpush1.msra.mxu0 0.0
    %135 = vmatprep.subr.mxu0 0.0
    %136 = vmatpush1.msra.mxu0 0.0
    %137 = vmatprep.subr.mxu0 0.0
    %138 = vmatpush1.msra.mxu0 0.0
    %139 = vmatprep.subr.mxu0 0.0
    %140 = vmatpush1.msra.mxu0 0.0
    %141 = vmatprep.subr.mxu0 0.0
    %142 = vmatpush1.msra.mxu0 0.0
    %143 = vmatprep.subr.mxu0 0.0
    %144 = vmatpush1.msra.mxu0 0.0
    %145 = vmatprep.subr.mxu0 0.0
    %146 = vmatpush1.msra.mxu0 0.0
    %147 = vmatprep.subr.mxu0 0.0
    %148 = vmatpush1.msra.mxu0 0.0
    %149 = vmatprep.subr.mxu0 0.0
    %150 = vmatpush1.msra.mxu0 0.0
    %151 = vmatprep.subr.mxu0 0.0
    %152 = vmatpush1.msra.mxu0 0.0
    %153 = vmatprep.subr.mxu0 0.0
    %154 = vmatpush1.msra.mxu0 0.0
    %155 = vmatprep.subr.mxu0 0.0
    %156 = vmatpush1.msra.mxu0 0.0
    %157 = vmatprep.subr.mxu0 0.0
    %158 = vmatpush1.msra.mxu0 0.0
    %159 = vmatprep.subr.mxu0 0.0
    %160 = vmatpush1.msra.mxu0 0.0
    %161 = vmatprep.subr.mxu0 0.0
    %162 = vmatpush1.msra.mxu0 0.0
    %163 = vmatprep.subr.mxu0 0.0
    %164 = vmatpush1.msra.mxu0 0.0
    %165 = vmatprep.subr.mxu0 0.0
    %166 = vmatpush1.msra.mxu0 0.0
    %167 = vmatprep.subr.mxu0 0.0
    %168 = vmatpush1.msra.mxu0 0.0
    %169 = vmatprep.subr.mxu0 0.0
    %170 = vmatpush1.msra.mxu0 0.0
    %171 = vmatprep.subr.mxu0 0.0
    %172 = vmatpush1.msra.mxu0 0.0
    %173 = vmatprep.subr.mxu0 0.0
    %174 = vmatpush1.msra.mxu0 0.0
    %175 = vmatprep.subr.mxu0 0.0
    %176 = vmatpush1.msra.mxu0 0.0
    %177 = vmatprep.subr.mxu0 0.0
    %178 = vmatpush1.msra.mxu0 0.0
    %179 = vmatprep.subr.mxu0 0.0
    %180 = vmatpush1.msra.mxu0 0.0
    %181 = vmatprep.subr.mxu0 0.0
    %182 = vmatpush1.msra.mxu0 0.0
    %183 = vmatprep.subr.mxu0 0.0
    %184 = vmatpush1.msra.mxu0 0.0
    %185 = vmatprep.mubr.f32.mxu0 0.0
    %186 = vmatmul.mubr.f32.gmra.mrb[0].mxu0 %v116
    %v187 = vpop.f32.mrb[0].mxu0
    %v188 = vadd.f32 0.0, %v187
    %v189 = vpop.f32.mrb[0].mxu0
    %190 = vdwg.mxu0
    %191 = vst.msk [vmem:[#allocation2] sm:$0x1] %vm96, %v188
    // Predicated region
    $region10: #{tpu_custom_call.1} parent=1 // pred_check
      _
    $region11: #{tpu_custom_call.1} parent=1 // pred_check_branch
      %193 = sbr.rel (0) target = $region13
    $region12: #{tpu_custom_call.1} parent=1 // pred_region
      %s195 = ssub.s32 16, 16
      %196 = vsyncadd [#allocation3], %s195
      %s198 = sshll.u32 [#allocation2], 4
      %s199 = int_to_ptr.vmem [resolvable:$true] %s198
      %201 = dma.vmem_to_hbm [thread:$0]  %s199, 16, %s2, [#allocation3]
    $region13: #{tpu_custom_call.1} parent=1 // pred_fallthru
      _
    // Predicated region
    $region14: #{tpu_custom_call.1} parent=1 // pred_check
      _
    $region15: #{tpu_custom_call.1} parent=1 // pred_check_branch
      %203 = sbr.rel (0) target = $region17
    $region16: #{tpu_custom_call.1} parent=1 // pred_region
      %204 = dma.done [#allocation3], 16
    $region17: #{tpu_custom_call.1} parent=1 // pred_fallthru
      _
    %205 = vsyncpa [#allocation3], 1

</llo_original>
